<compile_context>
chip_gen: v5e
topology: v5e:2x2
jax: 0.10.0
libtpu: 0.0.40
codegen_flags: <defaults>
</compile_context>

<pallas_src>
import math

import jax
import jax.numpy as jnp
from jax.experimental import pallas as pl
from jax.experimental.pallas import tpu as pltpu

_NEG_BIG = -1e30          # "minus infinity" for padded mixture components
_VMEM_LIMIT = 32 * 1024 * 1024


def _round_up(x, m):
    return (x + m - 1) // m * m


def _pick_batch_tile(n, tile_max=512):
    """Batch tile: multiple of 8, capped at tile_max; returns (tile_n, n_padded)."""
    if n <= tile_max:
        tile_n = _round_up(n, 8)
        return tile_n, tile_n
    return tile_max, _round_up(n, tile_max)


def _pick_out_tile(out_p):
    for t in (512, 256, 128):
        if out_p % t == 0:
            return t
    return out_p  # out_p is always a multiple of 128, so this is unreachable


# ----------------------------------------------------------------------------
# Decoder kernel: DGD.forward(z) = decoder(z) = z @ W + b   (tiled N x out_dim)
# ----------------------------------------------------------------------------
def _linear_decoder_kernel(z_ref, w_ref, b_ref, out_ref):
    y = jnp.dot(z_ref[...], w_ref[...], preferred_element_type=jnp.float32)
    out_ref[...] = (y + b_ref[...]).astype(out_ref.dtype)


def dgd_forward(z, w, b):
    """DGD.forward: apply the (linear) decoder to representations z."""
    n, d = z.shape
    out_dim = w.shape[1]

    out_p = _round_up(out_dim, 128)
    tile_out = _pick_out_tile(out_p)
    tile_n, n_pad = _pick_batch_tile(n)

    z_p = z if n_pad == n else jnp.pad(z, ((0, n_pad - n), (0, 0)))
    w_p = w if out_p == out_dim else jnp.pad(w, ((0, 0), (0, out_p - out_dim)))
    b_p = b if out_p == out_dim else jnp.pad(b, (0, out_p - out_dim))
    b_p = b_p.reshape(1, out_p)

    out = pl.pallas_call(
        _linear_decoder_kernel,
        out_shape=jax.ShapeDtypeStruct((n_pad, out_p), jnp.float32),
        grid=(n_pad // tile_n, out_p // tile_out),
        in_specs=[
            pl.BlockSpec((tile_n, d), lambda i, j: (i, 0)),
            pl.BlockSpec((d, tile_out), lambda i, j: (0, j)),
            pl.BlockSpec((1, tile_out), lambda i, j: (0, j)),
        ],
        out_specs=pl.BlockSpec((tile_n, tile_out), lambda i, j: (i, j)),
        compiler_params=pltpu.CompilerParams(
            dimension_semantics=("parallel", "parallel"),
            vmem_limit_bytes=_VMEM_LIMIT),
    )(z_p, w_p, b_p)
    return out[:n, :out_dim]


# ----------------------------------------------------------------------------
# GaussianMixture forward kernel (negative log density), diagonal covariance.
#
# Per batch tile:
#   quad[n,k] = sum_d ( -z^2 * a + z * 2*a*mu )        <- single MXU matmul
#   y[n,k]    = quad[n,k] + c[k]                       (c precomputed, (1,K))
#   out[n]    = -logsumexp_k(y[n,:])                   (prior folded into c)
# where a = 1/(2*cov) and
#   c[k] = -sum_d mu^2*a - lvf*sum_d log_var + pi_term + log_softmax(w)_k + prior
# (prior is constant over k, so folding it into c before logsumexp is exact.)
# ----------------------------------------------------------------------------
def _gmm_nll_kernel(z_ref, rhs_ref, c_ref, out_ref):
    z = z_ref[...]                                        # (TN, D)
    lhs = jnp.concatenate([z * z, z], axis=-1)            # (TN, 2D)
    quad = jax.lax.dot_general(
        lhs, rhs_ref[...], (((1,), (1,)), ((), ())),
        preferred_element_type=jnp.float32)               # (TN, Kp)
    y = quad + c_ref[...]                                 # (TN, Kp)
    m = jnp.max(y, axis=-1, keepdims=True)
    lse = m + jnp.log(jnp.sum(jnp.exp(y - m), axis=-1, keepdims=True))
    out_ref[...] = -lse                                   # (TN, 1)


def gmm_negative_log_density(z, mean, log_var, weight, prior_log_prob,
                             *, log_var_factor, pi_term):
    """GaussianMixture.forward(z): per-sample negative log density, shape (N,)."""
    n, d = z.shape
    k = mean.shape[0]
    kp = max(8, _round_up(k, 8))

    # z-independent per-component constants (hoisted out of the kernel).
    inv2cov = 0.5 * jnp.exp(-log_var)                                   # (K, D)
    rhs = jnp.concatenate([-inv2cov, 2.0 * inv2cov * mean], axis=-1)    # (K, 2D)
    c = (-jnp.sum(mean * mean * inv2cov, axis=-1)
         - log_var_factor * jnp.sum(log_var, axis=-1)
         + pi_term
         + jax.nn.log_softmax(weight)
         + prior_log_prob)                                              # (K,)

    rhs_p = jnp.zeros((kp, 2 * d), jnp.float32).at[:k].set(rhs.astype(jnp.float32))
    c_p = jnp.full((1, kp), _NEG_BIG, jnp.float32).at[0, :k].set(c.astype(jnp.float32))

    tile_n, n_pad = _pick_batch_tile(n)
    z_p = z if n_pad == n else jnp.pad(z, ((0, n_pad - n), (0, 0)))

    out = pl.pallas_call(
        _gmm_nll_kernel,
        out_shape=jax.ShapeDtypeStruct((n_pad, 1), jnp.float32),
        grid=(n_pad // tile_n,),
        in_specs=[
            pl.BlockSpec((tile_n, d), lambda i: (i, 0)),
            pl.BlockSpec((kp, 2 * d), lambda i: (0, 0)),   # replicated, not re-DMA'd
            pl.BlockSpec((1, kp), lambda i: (0, 0)),       # replicated, not re-DMA'd
        ],
        out_specs=pl.BlockSpec((tile_n, 1), lambda i: (i, 0)),
        compiler_params=pltpu.CompilerParams(
            dimension_semantics=("parallel",),
            vmem_limit_bytes=_VMEM_LIMIT),
    )(z_p, rhs_p, c_p)
    return out[:n, 0]


# ----------------------------------------------------------------------------
# Parameter setup (plain JAX glue), mirroring GaussianMixture.__init__ defaults:
#   covariance_type='diagonal', mean_init=(2.0, 5.0), sd_init=(0.5, 1.0), alpha=1
# ----------------------------------------------------------------------------
def softball_sample(key, n, dim, radius):
    k1, k2 = jax.random.split(key)
    s = jax.random.normal(k1, (n, dim), dtype=jnp.float32)
    s = s / jnp.linalg.norm(s, axis=-1, keepdims=True)
    local_len = radius * jnp.power(jax.random.uniform(k2, (n, 1), dtype=jnp.float32),
                                   1.0 / dim)
    return s * local_len


def gmm_prior_log_prob(mean, log_var, n_mix, dim,
                       mean_init=(2.0, 5.0), sd_init=(0.5, 1.0), alpha=1):
    """Scalar prior term (independent of z) — computed in plain JAX glue."""
    radius, sharpness = float(mean_init[0]), float(mean_init[1])
    # Dirichlet constant (alpha == 1, so the mixture-prob term is skipped).
    p = math.lgamma(n_mix * alpha) - n_mix * math.lgamma(alpha)
    # softball prior on means.
    softball_norm = (math.lgamma(1 + dim * 0.5)
                     - dim * (math.log(radius) + 0.5 * math.log(math.pi)))
    mean_norm = jnp.linalg.norm(mean, axis=-1)
    p = p + jnp.sum(softball_norm
                    - jnp.log1p(jnp.exp(sharpness * (mean_norm / radius - 1.0))))
    # Gaussian prior on -log_var: Normal(-2*log(sd_init[0]), sd_init[1]).
    lv_mu = -2.0 * math.log(sd_init[0])
    lv_sd = float(sd_init[1])
    x = -log_var
    p = p + jnp.sum(-0.5 * math.log(2.0 * math.pi) - math.log(lv_sd)
                    - 0.5 * jnp.square((x - lv_mu) / lv_sd))
    return p


# ----------------------------------------------------------------------------
# Pure-JAX references for verification (direct-difference form, f32 VPU math).
# ----------------------------------------------------------------------------
def gmm_ref(z, mean, log_var, weight, prior, log_var_factor, pi_term):
    cov = jnp.exp(log_var)
    diff = z[:, None, :] - mean[None, :, :]
    y = -jnp.sum(diff * diff / (2.0 * cov[None]), axis=-1)
    y = y - log_var_factor * jnp.sum(log_var, axis=-1)[None, :]
    y = y + pi_term
    y = y + jax.nn.log_softmax(weight)
    y = jax.scipy.special.logsumexp(y, axis=-1)
    return -(y + prior)


def _run_case(key, n, rep_dim, n_mix, out_dim):
    log_var_factor = 0.5                                   # diagonal covariance
    pi_term = -0.5 * rep_dim * math.log(2.0 * math.pi)

    k_mean, k_z, k_w, _ = jax.random.split(key, 4)

    gmm_mean = softball_sample(k_mean, n_mix, rep_dim, radius=2.0)
    gmm_log_var = jnp.full((n_mix, rep_dim), 2.0 * math.log(0.5), jnp.float32)
    gmm_weight = jnp.ones((n_mix,), jnp.float32)

    dec_w = 0.1 * jax.random.normal(k_w, (rep_dim, out_dim), dtype=jnp.float32)
    dec_b = jnp.zeros((out_dim,), jnp.float32)

    z = jax.random.normal(k_z, (n, rep_dim), dtype=jnp.float32)

    # DGD.forward(z) == decoder(z)
    y_dec = jax.block_until_ready(dgd_forward(z, dec_w, dec_b))

    # GMM negative log density (self.gmm(z) inside DGD.loss).
    prior = gmm_prior_log_prob(gmm_mean, gmm_log_var, n_mix, rep_dim)
    nll = jax.block_until_ready(
        gmm_negative_log_density(z, gmm_mean, gmm_log_var, gmm_weight, prior,
                                 log_var_factor=log_var_factor, pi_term=pi_term))

    # Verify against pure-JAX references (MXU runs at default precision, so
    # tolerances are bf16-pass friendly).
    y_dec_ref = z @ dec_w + dec_b
    nll_ref = gmm_ref(z, gmm_mean, gmm_log_var, gmm_weight, prior,
                      log_var_factor, pi_term)
    assert y_dec.shape == (n, out_dim)
    assert nll.shape == (n,)
    assert jnp.allclose(y_dec, y_dec_ref, rtol=1e-2, atol=1e-2), "decoder mismatch"
    assert jnp.allclose(nll, nll_ref, rtol=1e-2, atol=1e-2), "gmm nll mismatch"


# TODO(synk): GMM sampling / component_sample / sample_new_points use host-side
# torch.distributions RNG in the reference; they are host-glue (jax.random),
# not kernels, and are not implemented here.

if __name__ == "__main__":
    key = jax.random.PRNGKey(0)
    k0, k1 = jax.random.split(key)

    # Small shapes consistent with the module.
    _run_case(k0, n=8, rep_dim=32, n_mix=4, out_dim=64)
    # Slightly larger case to exercise padding + lane-dense tiling paths.
    _run_case(k1, n=260, rep_dim=32, n_mix=4, out_dim=256)

    print("KERNEL_OK")
</pallas_src>

<mosaic_0001>
module attributes {stable_mosaic.version = 11 : i64} {
  func.func @_linear_decoder_kernel(%arg0: i32, %arg1: i32, %arg2: memref<8x32xf32, #tpu.memory_space<vmem>>, %arg3: memref<32x128xf32, #tpu.memory_space<vmem>>, %arg4: memref<1x128xf32, #tpu.memory_space<vmem>>, %arg5: memref<8x128xf32, #tpu.memory_space<vmem>>) attributes {dimension_semantics = [#tpu.dimension_semantics<parallel>, #tpu.dimension_semantics<parallel>], iteration_bounds = array<i64: 1, 1>, scalar_prefetch = 0 : i64, scratch_operands = 0 : i64, tpu.core_type = #tpu.core_type<tc>, window_params = [{transform_indices = @transform_0, window_bounds = array<i64: 8, 32>}, {transform_indices = @transform_1, window_bounds = array<i64: 32, 128>}, {transform_indices = @transform_2, window_bounds = array<i64: 1, 128>}, {transform_indices = @transform_3, window_bounds = array<i64: 8, 128>}]} {
    %c0 = arith.constant 0 : index
    %c0_0 = arith.constant 0 : index
    %0 = vector.load %arg2[%c0, %c0_0] : memref<8x32xf32, #tpu.memory_space<vmem>>, vector<8x32xf32>
    %c0_1 = arith.constant 0 : index
    %c0_2 = arith.constant 0 : index
    %1 = vector.load %arg3[%c0_1, %c0_2] : memref<32x128xf32, #tpu.memory_space<vmem>>, vector<32x128xf32>
    %cst = arith.constant dense<0.000000e+00> : vector<8x128xf32>
    %2 = tpu.matmul %0, %1, %cst {dimension_numbers = #tpu.dot_dimension_numbers<[1], [0], [0], [1], [0, 0, 1, 1], [], []>} : vector<8x32xf32>, vector<32x128xf32>, vector<8x128xf32> -> vector<8x128xf32>
    %c0_3 = arith.constant 0 : index
    %c0_4 = arith.constant 0 : index
    %3 = vector.load %arg4[%c0_3, %c0_4] : memref<1x128xf32, #tpu.memory_space<vmem>>, vector<1x128xf32>
    %4 = vector.broadcast %3 : vector<1x128xf32> to vector<8x128xf32>
    %5 = arith.addf %2, %4 : vector<8x128xf32>
    %c0_5 = arith.constant 0 : index
    %c0_6 = arith.constant 0 : index
    %6 = vector.load %arg5[%c0_5, %c0_6] : memref<8x128xf32, #tpu.memory_space<vmem>>, vector<8x128xf32>
    tpu.vector_store %arg5[%c0_5, %c0_6], %5 {strides = array<i32>} : memref<8x128xf32, #tpu.memory_space<vmem>>, vector<8x128xf32>,
    return
  }
  func.func @transform_0(%arg0: i32, %arg1: i32) -> (i32, i32) {
    %c0_i32 = arith.constant 0 : i32
    %c0_i32_0 = arith.constant 0 : i32
    return %arg0, %c0_i32 : i32, i32
  }
  func.func @transform_1(%arg0: i32, %arg1: i32) -> (i32, i32) {
    %c0_i32 = arith.constant 0 : i32
    %c0_i32_0 = arith.constant 0 : i32
    return %c0_i32, %arg1 : i32, i32
  }
  func.func @transform_2(%arg0: i32, %arg1: i32) -> (i32, i32) {
    %c0_i32 = arith.constant 0 : i32
    %c0_i32_0 = arith.constant 0 : i32
    return %c0_i32, %arg1 : i32, i32
  }
  func.func @transform_3(%arg0: i32, %arg1: i32) -> (i32, i32) {
    %c0_i32 = arith.constant 0 : i32
    return %arg0, %arg1 : i32, i32
  }
}

</mosaic_0001>

<llo_original>
// kernel: tpu_custom_call.1
$region0: #{tpu_custom_call.1}
  #allocation0 [shape = 'u32[]', space=smem, size = 0x4, offset = 0x4, fixed_abs, tag = 'smem constant byte address 0x4 - core index']
  #allocation1 [shape = 'u32[72,128]{1,0:T(1,128)}', space=vmem, size = 0x9000, scoped, tag = 'internal scratch']
  %s0 = inlined_call_operand.hbm [shape: f32[8,32], index: 0, kind: input, shape index: {}]
  %s1 = inlined_call_operand.hbm [shape: f32[32,128], index: 1, kind: input, shape index: {}]
  %s2 = inlined_call_operand.vmem [shape: f32[1,128], index: 2, kind: input, shape index: {}]
  %s3 = inlined_call_operand.hbm [shape: f32[8,128], index: 3, kind: output, shape index: {}]
  %s4 = sld [smem:[#allocation0]]
  $region30: #{tpu_custom_call.1} parent=0
    _
  %s6 = ssub.s32 1, %s4
  %s7 = scalar_select 0, %s6, %s4
  $region1: #{tpu_custom_call.1} parent=0
    #allocation2 [shape = 'u8[4096]{0}', space=vmem, size = 0x1000, scoped, tag = 'input window, operand 0, single buffered']
    #allocation3 [shape = 's32[1]{0}', space=sflag, size = 0x4, scoped, tag = 'scoped memory for tpu_custom_call.1']
    #allocation4 [shape = 's32[1]{0}', space=sflag, size = 0x4, scoped, tag = 'scoped memory for tpu_custom_call.1']
    #allocation5 [shape = 'u8[16384]{0}', space=vmem, size = 0x4000, scoped, tag = 'input window, operand 1, single buffered']
    #allocation6 [shape = 's32[1]{0}', space=sflag, size = 0x4, scoped, tag = 'scoped memory for tpu_custom_call.1']
    #allocation7 [shape = 'u8[4096]{0}', space=vmem, size = 0x1000, scoped, tag = 'output window, operand 0, single buffered']
    %8 = vsyncpa [#allocation3], 0
    %9 = vsyncpa [#allocation6], 0
    %10 = vsyncpa [#allocation4], 0
    // Predicated region
    $region2: #{tpu_custom_call.1} parent=1 // pred_check
      _
    $region3: #{tpu_custom_call.1} parent=1 // pred_check_branch
      %12 = sbr.rel (0) target = $region5
    $region4: #{tpu_custom_call.1} parent=1 // pred_region
      %14 = vsyncadd [#allocation3], 0
      %s16 = sshll.u32 %s0, 4
      %s17 = int_to_ptr.hbm [resolvable:$true] %s16
      %s18 = sshll.u32 [#allocation2], 4
      %s19 = int_to_ptr.vmem [resolvable:$true] %s18
      %21 = dma.hbm_to_vmem [thread:$0]  %s17, 128, %s19, [#allocation3]
    $region5: #{tpu_custom_call.1} parent=1 // pred_fallthru
      _
    // Predicated region
    $region6: #{tpu_custom_call.1} parent=1 // pred_check
      _
    $region7: #{tpu_custom_call.1} parent=1 // pred_check_branch
      %23 = sbr.rel (0) target = $region9
    $region8: #{tpu_custom_call.1} parent=1 // pred_region
      %25 = vsyncadd [#allocation6], 0
      %s26 = sshll.u32 %s1, 4
      %s27 = int_to_ptr.hbm [resolvable:$true] %s26
      %s28 = sshll.u32 [#allocation5], 4
      %s29 = int_to_ptr.vmem [resolvable:$true] %s28
      %34 = dma.hbm_to_vmem [thread:$0]  %s27, 512, %s29, [#allocation6], 128, 128, 8
    $region9: #{tpu_custom_call.1} parent=1 // pred_fallthru
      _
    // Predicated region
    $region10: #{tpu_custom_call.1} parent=1 // pred_check
      _
    $region11: #{tpu_custom_call.1} parent=1 // pred_check_branch
      %36 = sbr.rel (0) target = $region13
    $region12: #{tpu_custom_call.1} parent=1 // pred_region
      _
    $region13: #{tpu_custom_call.1} parent=1 // pred_fallthru
      _
    // Predicated region
    $region14: #{tpu_custom_call.1} parent=1 // pred_check
      _
    $region15: #{tpu_custom_call.1} parent=1 // pred_check_branch
      %38 = sbr.rel (0) target = $region17
    $region16: #{tpu_custom_call.1} parent=1 // pred_region
      %40 = dma.done [#allocation3], 128
    $region17: #{tpu_custom_call.1} parent=1 // pred_fallthru
      _
    // Predicated region
    $region18: #{tpu_custom_call.1} parent=1 // pred_check
      _
    $region19: #{tpu_custom_call.1} parent=1 // pred_check_branch
      %42 = sbr.rel (0) target = $region21
    $region20: #{tpu_custom_call.1} parent=1 // pred_region
      %44 = dma.done [#allocation6], 512
    $region21: #{tpu_custom_call.1} parent=1 // pred_fallthru
      _
    %v45 = vld [vmem:[#allocation2] sm:$0xff]
    %v46 = vld [vmem:[#allocation5] sm:$0xff]
    %v47 = vld [vmem:[#allocation5 + $0x8] sm:$0xff]
    %v48 = vld [vmem:[#allocation5 + $0x10] sm:$0xff]
    %v49 = vld [vmem:[#allocation5 + $0x18] sm:$0xff]
    %v50 = vld [vmem:[%s2] sm:$0x1]
    %v52 = vperm.slane %v50, 0
    %vm54 = vcmask 261120
    %v56 = vsel %vm54, %v45, 0
    %58 = vmatpush.msra.mxu0 0.0
    %59 = vmatpush.msra.mxu0 0.0
    %60 = vmatpush.msra.mxu0 0.0
    %61 = vmatpush.msra.mxu0 0.0
    %62 = vmatpush.msra.mxu0 0.0
    %63 = vmatpush.msra.mxu0 0.0
    %64 = vmatpush.msra.mxu0 0.0
    %65 = vmatpush.msra.mxu0 0.0
    %66 = vmatpush.msra.mxu0 0.0
    %67 = vmatpush.msra.mxu0 0.0
    %68 = vmatpush.msra.mxu0 0.0
    %69 = vmatpush.msra.mxu0 0.0
    %70 = vmatpush.msra.mxu0 %v49
    %71 = vmatpush.msra.mxu0 %v48
    %72 = vmatpush.msra.mxu0 %v47
    %73 = vmatpush.msra.mxu0 %v46
    %74 = vmatmul.f32.gmra.mxu0 %v56
    %v75 = vpop.f32.mrf.mxu0
    %v76 = vadd.f32 %v52, %v75
    %77 = vdwg.mxu0
    %78 = vst [vmem:[#allocation7] sm:$0xff] %v76
    // Predicated region
    $region22: #{tpu_custom_call.1} parent=1 // pred_check
      _
    $region23: #{tpu_custom_call.1} parent=1 // pred_check_branch
      %80 = sbr.rel (0) target = $region25
    $region24: #{tpu_custom_call.1} parent=1 // pred_region
      %82 = vsyncadd [#allocation4], 0
      %s84 = sshll.u32 [#allocation7], 4
      %s85 = int_to_ptr.vmem [resolvable:$true] %s84
      %s86 = sshll.u32 %s3, 4
      %s87 = int_to_ptr.hbm [resolvable:$true] %s86
      %89 = dma.vmem_to_hbm [thread:$0]  %s85, 128, %s87, [#allocation4]
    $region25: #{tpu_custom_call.1} parent=1 // pred_fallthru
      _
    // Predicated region
    $region26: #{tpu_custom_call.1} parent=1 // pred_check
      _
    $region27: #{tpu_custom_call.1} parent=1 // pred_check_branch
      %91 = sbr.rel (0) target = $region29
    $region28: #{tpu_custom_call.1} parent=1 // pred_region
      %93 = dma.done [#allocation4], 128
    $region29: #{tpu_custom_call.1} parent=1 // pred_fallthru
      _
    %94 = vsyncpa [#allocation3], 1
    %95 = vsyncpa [#allocation6], 1
    %96 = vsyncpa [#allocation4], 1

</llo_original>
